<compile_context>
chip_gen: v7x
topology: tpu7x:2x2x1
jax: 0.10.0
libtpu: 0.0.40
codegen_flags: <defaults>
</compile_context>

<pallas_src>
import jax
import jax.numpy as jnp
from jax.experimental import pallas as pl
from jax.experimental.pallas import tpu as pltpu


def agg_kernel(a_ref, y_ref, invdeg_ref, b_ref, o_ref, acc_ref):
    """acc += A_tile @ Y_tile ; at last reduction step: o = inv_deg * acc + b."""
    k = pl.program_id(1)
    tk = a_ref.shape[1]

    @pl.when(k == 0)
    def _():
        acc_ref[...] = jnp.zeros_like(acc_ref)

    if y_ref.shape[0] == tk:
        # Streaming Y: this block already holds the reduction rows for step k.
        y = y_ref[...]
    else:
        # Resident Y: the whole (Np, Dp) activation lives in VMEM; slice rows.
        start = pl.multiple_of(k * tk, tk)
        y = y_ref[pl.ds(start, tk), :]

    acc_ref[...] += jnp.dot(a_ref[...], y, preferred_element_type=jnp.float32)

    @pl.when(k == pl.num_programs(1) - 1)
    def _():
        # Row scale (mean aggregation, f32) + bias (f32), lane-dense store.
        o_ref[...] = (invdeg_ref[...] * acc_ref[...] + b_ref[...]).astype(o_ref.dtype)


def gcn_aggregate(a_p, y_p, invdeg_p, b_p, *, tm, tk, y_resident_budget=8 << 20):
    """out = diag(invdeg) @ (a_p @ y_p) + b_p  on padded inputs.

    a_p: (Np, Np) bf16 raw adjacency; y_p: (Np, Dp) bf16 pre-scaled activations;
    invdeg_p: (Np, 1) f32; b_p: (1, Dp) f32.  Returns (Np, Dp) f32."""
    Np = a_p.shape[0]
    Dp = y_p.shape[1]
    assert Np % tm == 0 and Np % tk == 0, "padded N must be divisible by tm and tk"
    grid = (Np // tm, Np // tk)

    y_bytes = Np * Dp * y_p.dtype.itemsize
    resident = y_bytes <= y_resident_budget
    if resident:
        y_spec = pl.BlockSpec((Np, Dp), lambda i, k: (0, 0))       # DMA'd once, stays in VMEM
    else:
        y_spec = pl.BlockSpec((tk, Dp), lambda i, k: (k, 0))       # stream reduction rows

    # Working-set estimate (double-buffered blocks + f32 accumulator) -> VMEM limit.
    a_buf = 2 * tm * tk * 2
    y_buf = 2 * (Np * Dp * 2 if resident else tk * Dp * 2)
    inv_buf = 2 * tm * 128 * 4          # (tm, 1) pads to 128 lanes
    bias_buf = 2 * 8 * Dp * 4           # (1, Dp) pads to 8 sublanes
    out_buf = 2 * tm * Dp * 4
    acc_buf = tm * Dp * 4
    needed = a_buf + y_buf + inv_buf + bias_buf + out_buf + acc_buf
    vmem_limit = int(min(max(needed + (4 << 20), 16 << 20), 48 << 20))

    return pl.pallas_call(
        agg_kernel,
        out_shape=jax.ShapeDtypeStruct((Np, Dp), jnp.float32),
        grid=grid,
        in_specs=[
            pl.BlockSpec((tm, tk), lambda i, k: (i, k)),   # A tile (only stream that changes every step)
            y_spec,                                        # activations (resident or streamed)
            pl.BlockSpec((tm, 1), lambda i, k: (i, 0)),    # 1/in_deg per output row
            pl.BlockSpec((1, Dp), lambda i, k: (0, 0)),    # bias, resident
        ],
        out_specs=pl.BlockSpec((tm, Dp), lambda i, k: (i, 0)),
        scratch_shapes=[pltpu.VMEM((tm, Dp), jnp.float32)],
        compiler_params=pltpu.CompilerParams(
            dimension_semantics=("parallel", "arbitrary"),
            vmem_limit_bytes=vmem_limit),
    )(a_p, y_p, invdeg_p, b_p)


def _round_up(n, m):
    return ((n + m - 1) // m) * m


def _pad2(x, rows, cols, dtype):
    y = jnp.pad(x, ((0, rows - x.shape[0]), (0, cols - x.shape[1])))
    return y.astype(dtype)


def _choose_tile(N):
    """Biggest square tile (512/256/128) that still leaves >=2 row tiles for megacore."""
    for t in (512, 256, 128):
        np_ = _round_up(N, t)
        if np_ // t >= 2:
            return t, np_
    t = 128
    return t, _round_up(N, t)


def graph_gcn_forward(adj, features, params, use_constraint=True, *, tile=None):
    """GraphGCN.forward: two stacked GCN layers sharing the same graph.

    adj[dst, src] = 1 if edge src -> dst (so in_degree(dst) = row sum)."""
    N = adj.shape[0]
    hid_dim = params["w1"].shape[1]
    out_dim = params["w2"].shape[1]

    adj = adj.astype(jnp.float32)
    in_deg = jnp.sum(adj, axis=1, keepdims=True)                    # (N, 1)
    inv_deg = jnp.where(in_deg > 0, 1.0 / in_deg, 0.0)              # DGL mean -> 0 for isolated nodes
    if use_constraint:
        c = 1.0 / jnp.sqrt(in_deg + 1.0)
    else:
        c = jnp.ones_like(in_deg)

    if tile is None:
        T, Np = _choose_tile(N)
    else:
        T = tile
        Np = _round_up(N, T)

    LANE = 128
    Dhidp = _round_up(hid_dim, LANE)
    Doutp = _round_up(out_dim, LANE)

    a_p = _pad2(adj, Np, Np, jnp.bfloat16)          # raw 0/1 adjacency, exact in bf16
    invdeg_p = _pad2(inv_deg, Np, 1, jnp.float32)

    # ---- layer 1: Y1 = (c ⊙ X) @ W1 (small XLA matmul), then Pallas aggregation.
    y1 = (features * c) @ params["w1"]                              # (N, hid) f32
    y1_p = _pad2(y1, Np, Dhidp, jnp.bfloat16)
    b1_p = _pad2(params["b1"], 1, Dhidp, jnp.float32)
    h1 = gcn_aggregate(a_p, y1_p, invdeg_p, b1_p, tm=T, tk=T)[:N, :hid_dim]

    # ---- layer 2: same graph, hidden activations.
    y2 = (h1 * c) @ params["w2"]                                    # (N, out) f32
    y2_p = _pad2(y2, Np, Doutp, jnp.bfloat16)
    b2_p = _pad2(params["b2"], 1, Doutp, jnp.float32)
    h2 = gcn_aggregate(a_p, y2_p, invdeg_p, b2_p, tm=T, tk=T)
    return h2[:N, :out_dim]


def init_params(key, in_dim, hid_dim, out_dim):
    """Deterministic nn.Linear-style init (uniform +/- 1/sqrt(fan_in))."""
    k1, k2, k3, k4 = jax.random.split(key, 4)
    s1 = 1.0 / jnp.sqrt(in_dim)
    s2 = 1.0 / jnp.sqrt(hid_dim)
    return {
        # stored pre-transposed so the wrapper computes x @ W directly
        "w1": jax.random.uniform(k1, (in_dim, hid_dim), jnp.float32, -s1, s1),
        "b1": jax.random.uniform(k2, (1, hid_dim), jnp.float32, -s1, s1),
        "w2": jax.random.uniform(k3, (hid_dim, out_dim), jnp.float32, -s2, s2),
        "b2": jax.random.uniform(k4, (1, out_dim), jnp.float32, -s2, s2),
    }


if __name__ == "__main__":
    key = jax.random.PRNGKey(0)
    k_graph, k_feat, k_par = jax.random.split(key, 3)

    N = 200         # number of graph nodes (pads to 256 -> 2x2 tile grid)
    IN_DIM = 32     # in_dimension
    HID_DIM = 32    # hidden_dimension
    OUT_DIM = 16    # out_dimension

    # Deterministic random graph: adj[dst, src] = 1 if edge src -> dst.
    adj = (jax.random.uniform(k_graph, (N, N)) < 0.1).astype(jnp.float32)
    features = jax.random.normal(k_feat, (N, IN_DIM), jnp.float32)
    params = init_params(k_par, IN_DIM, HID_DIM, OUT_DIM)

    out = graph_gcn_forward(adj, features, params, use_constraint=True)
    jax.block_until_ready(out)
    assert out.shape == (N, OUT_DIM)

    # Pure-JAX reference mirroring the same re-association and dtype pipeline
    # (bf16 streams for the N^2 aggregation, f32 accumulation and scalings).
    in_deg = jnp.sum(adj, axis=1, keepdims=True)
    inv_d = jnp.where(in_deg > 0, 1.0 / in_deg, 0.0)
    c = 1.0 / jnp.sqrt(in_deg + 1.0)
    a_b = adj.astype(jnp.bfloat16)

    y1 = ((features * c) @ params["w1"]).astype(jnp.bfloat16)
    h1 = inv_d * jnp.dot(a_b, y1, preferred_element_type=jnp.float32) + params["b1"]
    y2 = ((h1 * c) @ params["w2"]).astype(jnp.bfloat16)
    ref = inv_d * jnp.dot(a_b, y2, preferred_element_type=jnp.float32) + params["b2"]

    assert jnp.allclose(out, ref, atol=2e-2, rtol=2e-2), "mismatch vs reference"

    print("KERNEL_OK")
</pallas_src>

<mosaic_0001>
module attributes {stable_mosaic.version = 11 : i64} {
  func.func @agg_kernel(%arg0: i32, %arg1: i32, %arg2: memref<128x128xbf16, #tpu.memory_space<vmem>>, %arg3: memref<256x128xbf16, #tpu.memory_space<vmem>>, %arg4: memref<128x1xf32, #tpu.memory_space<vmem>>, %arg5: memref<1x128xf32, #tpu.memory_space<vmem>>, %arg6: memref<128x128xf32, #tpu.memory_space<vmem>>, %arg7: memref<128x128xf32, #tpu.memory_space<vmem>>) attributes {dimension_semantics = [#tpu.dimension_semantics<parallel>, #tpu.dimension_semantics<arbitrary>], iteration_bounds = array<i64: 2, 2>, scalar_prefetch = 0 : i64, scratch_operands = 1 : i64, tpu.core_type = #tpu.core_type<tc>, window_params = [{transform_indices = @transform_0, window_bounds = array<i64: 128, 128>}, {pipeline_mode = #tpu.pipeline_mode<synchronous>, transform_indices = @transform_1, window_bounds = array<i64: 256, 128>}, {transform_indices = @transform_2, window_bounds = array<i64: 128, 1>}, {pipeline_mode = #tpu.pipeline_mode<synchronous>, transform_indices = @transform_3, window_bounds = array<i64: 1, 128>}, {transform_indices = @transform_4, window_bounds = array<i64: 128, 128>}]} {
    %c0_i32 = arith.constant 0 : i32
    %0 = arith.cmpi eq, %arg1, %c0_i32 : i32
    %1 = arith.extui %0 : i1 to i32
    %c0_i32_0 = arith.constant 0 : i32
    %2 = arith.cmpi ne, %1, %c0_i32_0 : i32
    scf.if %2 {
      %cst_8 = arith.constant 0.000000e+00 : f32
      %15 = vector.broadcast %cst_8 : f32 to vector<128x128xf32>
      %c0_9 = arith.constant 0 : index
      %c0_10 = arith.constant 0 : index
      %16 = vector.load %arg7[%c0_9, %c0_10] : memref<128x128xf32, #tpu.memory_space<vmem>>, vector<128x128xf32>
      tpu.vector_store %arg7[%c0_9, %c0_10], %15 {strides = array<i32>} : memref<128x128xf32, #tpu.memory_space<vmem>>, vector<128x128xf32>,
    } else {
    }
    %c128_i32 = arith.constant 128 : i32
    %3 = arith.muli %arg1, %c128_i32 : i32
    %4 = tpu.assume_multiple %3, 128 : i32
    %5 = arith.index_cast %4 : i32 to index
    %c0 = arith.constant 0 : index
    %6 = vector.load %arg3[%5, %c0] : memref<256x128xbf16, #tpu.memory_space<vmem>>, vector<128x128xbf16>
    %c0_1 = arith.constant 0 : index
    %c0_2 = arith.constant 0 : index
    %7 = vector.load %arg7[%c0_1, %c0_2] : memref<128x128xf32, #tpu.memory_space<vmem>>, vector<128x128xf32>
    %c0_3 = arith.constant 0 : index
    %c0_4 = arith.constant 0 : index
    %8 = vector.load %arg2[%c0_3, %c0_4] : memref<128x128xbf16, #tpu.memory_space<vmem>>, vector<128x128xbf16>
    %cst = arith.constant dense<0.000000e+00> : vector<128x128xf32>
    %9 = tpu.matmul %8, %6, %cst {dimension_numbers = #tpu.dot_dimension_numbers<[1], [0], [0], [1], [0, 0, 1, 1], [], []>} : vector<128x128xbf16>, vector<128x128xbf16>, vector<128x128xf32> -> vector<128x128xf32>
    %10 = arith.addf %7, %9 : vector<128x128xf32>
    %c0_5 = arith.constant 0 : index
    %c0_6 = arith.constant 0 : index
    %11 = vector.load %arg7[%c0_5, %c0_6] : memref<128x128xf32, #tpu.memory_space<vmem>>, vector<128x128xf32>
    tpu.vector_store %arg7[%c0_5, %c0_6], %10 {strides = array<i32>} : memref<128x128xf32, #tpu.memory_space<vmem>>, vector<128x128xf32>,
    %c1_i32 = arith.constant 1 : i32
    %12 = arith.cmpi eq, %arg1, %c1_i32 : i32
    %13 = arith.extui %12 : i1 to i32
    %c0_i32_7 = arith.constant 0 : i32
    %14 = arith.cmpi ne, %13, %c0_i32_7 : i32
    scf.if %14 {
      %c0_8 = arith.constant 0 : index
      %c0_9 = arith.constant 0 : index
      %15 = vector.load %arg4[%c0_8, %c0_9] : memref<128x1xf32, #tpu.memory_space<vmem>>, vector<128x1xf32>
      %c0_10 = arith.constant 0 : index
      %c0_11 = arith.constant 0 : index
      %16 = vector.load %arg7[%c0_10, %c0_11] : memref<128x128xf32, #tpu.memory_space<vmem>>, vector<128x128xf32>
      %17 = vector.broadcast %15 : vector<128x1xf32> to vector<128x128xf32>
      %18 = arith.mulf %17, %16 : vector<128x128xf32>
      %c0_12 = arith.constant 0 : index
      %c0_13 = arith.constant 0 : index
      %19 = vector.load %arg5[%c0_12, %c0_13] : memref<1x128xf32, #tpu.memory_space<vmem>>, vector<1x128xf32>
      %20 = vector.broadcast %19 : vector<1x128xf32> to vector<128x128xf32>
      %21 = arith.addf %18, %20 : vector<128x128xf32>
      %c0_14 = arith.constant 0 : index
      %c0_15 = arith.constant 0 : index
      %22 = vector.load %arg6[%c0_14, %c0_15] : memref<128x128xf32, #tpu.memory_space<vmem>>, vector<128x128xf32>
      tpu.vector_store %arg6[%c0_14, %c0_15], %21 {strides = array<i32>} : memref<128x128xf32, #tpu.memory_space<vmem>>, vector<128x128xf32>,
    } else {
    }
    return
  }
  func.func @transform_0(%arg0: i32, %arg1: i32) -> (i32, i32) {
    %c0_i32 = arith.constant 0 : i32
    return %arg0, %arg1 : i32, i32
  }
  func.func @transform_1(%arg0: i32, %arg1: i32) -> (i32, i32) {
    %c0_i32 = arith.constant 0 : i32
    %c0_i32_0 = arith.constant 0 : i32
    %c0_i32_1 = arith.constant 0 : i32
    return %c0_i32, %c0_i32_0 : i32, i32
  }
  func.func @transform_2(%arg0: i32, %arg1: i32) -> (i32, i32) {
    %c0_i32 = arith.constant 0 : i32
    %c0_i32_0 = arith.constant 0 : i32
    return %arg0, %c0_i32 : i32, i32
  }
  func.func @transform_3(%arg0: i32, %arg1: i32) -> (i32, i32) {
    %c0_i32 = arith.constant 0 : i32
    %c0_i32_0 = arith.constant 0 : i32
    %c0_i32_1 = arith.constant 0 : i32
    return %c0_i32, %c0_i32_0 : i32, i32
  }
  func.func @transform_4(%arg0: i32, %arg1: i32) -> (i32, i32) {
    %c0_i32 = arith.constant 0 : i32
    %c0_i32_0 = arith.constant 0 : i32
    return %arg0, %c0_i32 : i32, i32
  }
}

</mosaic_0001>

<llo_original>
// kernel: tpu_custom_call.1
$region0: #{tpu_custom_call.1}
  #allocation0 [shape = 'u32[]', space=smem, size = 0x4, offset = 0x4, fixed_abs, tag = 'smem constant byte address 0x4 - core index']
  #allocation1 [shape = 'u32[144,128]{1,0:T(1,128)}', space=vmem, size = 0x12000, scoped, tag = 'internal scratch']
  #allocation2 [shape = 'f32[128,128]{1,0:T(8,128)}', space=vmem, size = 0x10000, scoped, tag = 'scratch operand']
  %s0 = inlined_call_operand.vmem [shape: bf16[256,256], index: 0, kind: input, shape index: {}]
  %s1 = inlined_call_operand.hbm [shape: bf16[256,128], index: 1, kind: input, shape index: {}]
  %s2 = inlined_call_operand.vmem [shape: f32[256,1], index: 2, kind: input, shape index: {}]
  %s3 = inlined_call_operand.vmem [shape: f32[1,128], index: 3, kind: input, shape index: {}]
  %s4 = inlined_call_operand.hbm [shape: f32[256,128], index: 4, kind: output, shape index: {}]
  %s5 = sld [smem:[#allocation0]]
  $region102: #{tpu_custom_call.1} parent=0
    _
  %s7 = ssub.s32 1, %s5
  %s8 = scalar_select 0, %s7, %s5
  $region1: #{tpu_custom_call.1} parent=0
    #allocation3 [shape = 'u8[65536]{0}', space=vmem, size = 0x10000, scoped, tag = 'input window, operand 0']
    #allocation4 [shape = 'u8[65536]{0}', space=vmem, size = 0x10000, scoped, tag = 'input window, operand 1, single buffered']
    #allocation5 [shape = 's32[2]{0}', space=sflag, size = 0x8, scoped, tag = 'scoped memory for tpu_custom_call.1']
    #allocation6 [shape = 's32[2]{0}', space=sflag, size = 0x8, scoped, tag = 'scoped memory for tpu_custom_call.1']
    #allocation7 [shape = 'u8[131072]{0}', space=vmem, size = 0x20000, scoped, tag = 'output window, operand 0']
    %9 = vsyncpa [#allocation5], 0
    %10 = vsyncpa [#allocation6], 0
    %s11 = scalar_lea.sflag [#allocation6], 1
    %12 = vsyncpa %s11, 0
    loop: start=0, step=1, limit=6
    $region2: #{tpu_custom_call.1} parent=1 // loop_pre_header
      _
    $region3: #{tpu_custom_call.1} parent=1 // loop_header
      %s14 = sphi 0, %s18
      %p15 = scmp.ge.s32.totalorder %s14, 6
      %s21 = sphi 0, %s33
      %s22 = sphi 0, %s29
      %s23 = sphi 0, %s21
      %s24 = sphi 0, %s22
      %s25 = sphi 0, %s23
      %s26 = sphi 0, %s24
      %s38 = sphi 0, %s40
      %s41 = sphi 0, %s38
      %s42 = sphi 0, %s41
      %s58 = sphi 0, %s42
      %s62 = sphi 0, %s62
      %s64 = sphi 0, %s62
      %s65 = sphi 0, %s64
      %s79 = sphi 0, %s65
      %s85 = sphi 0, %s87
      %s88 = sphi 0, %s85
      %s89 = sphi 0, %s88
      %s105 = sphi 0, %s89
      %s109 = sphi 0, %s109
      %s111 = sphi 0, %s109
      %s112 = sphi 0, %s111
      %s126 = sphi 0, %s112
      %s132 = sphi 0, %s134
      %s135 = sphi 0, %s132
      %s136 = sphi 0, %s135
      %s152 = sphi 0, %s136
    $region4: #{tpu_custom_call.1} parent=1 // loop_header_branch
      %17 = sbr.rel (%p15) target = $region8
    $region5: #{tpu_custom_call.1} parent=1 // loop_body
      %s19 = ssub.s32 %s14, 1
      %s20 = ssub.s32 %s14, 2
      %s27 = sadd.s32 1, %s22
      %p28 = scmp.ge.s32.totalorder %s27, 2
      %s29 = scalar_select %p28, 0, %s27
      %s30 = sadd.s32 1, %s21
      %s31 = scalar_select %p28, %s30, %s21
      %p32 = scmp.ge.s32.totalorder %s31, 2
      %s33 = scalar_select %p32, 0, %s31
      %s34 = ssub.s32 %s21, %s33
      %s35 = ssub.s32 %s22, %s29
      %s36 = sor.u32 %s34, %s35
      %p37 = scmp.eq.s32.totalorder %s36, 0
      %s39 = sadd.s32 %s38, 1
      %s40 = scalar_select %p37, %s38, %s39
      %p43 = pneg %p37
      %p44 = scmp.eq.s32.totalorder %s14, 3
      %p45 = por %p43, %p44
      %p46 = scmp.ne.s32.totalorder %s38, %s41
      %p47 = scmp.eq.s32.totalorder %s14, 0
      %p48 = por %p46, %p47
      %p49 = scmp.ne.s32.totalorder %s38, %s41
      %p50 = scmp.eq.s32.totalorder %s19, 3
      %p51 = por %p49, %p50
      %p52 = scmp.ne.s32.totalorder %s41, %s42
      %p53 = scmp.eq.s32.totalorder %s19, 0
      %p54 = por %p52, %p53
      %p55 = scmp.ne.s32.totalorder %s41, %s42
      %p56 = scmp.eq.s32.totalorder %s20, 3
      %p57 = por %p55, %p56
      %p59 = scmp.ne.s32.totalorder %s42, %s58
      %p60 = scmp.eq.s32.totalorder %s20, 0
      %p61 = por %p59, %p60
      %s63 = sadd.s32 %s62, 1
      %p66 = scmp.eq.s32.totalorder %s14, 3
      %p67 = scmp.ne.s32.totalorder %s62, %s64
      %p68 = scmp.eq.s32.totalorder %s14, 0
      %p69 = por %p67, %p68
      %p70 = scmp.ne.s32.totalorder %s62, %s64
      %p71 = scmp.eq.s32.totalorder %s19, 3
      %p72 = por %p70, %p71
      %p73 = scmp.ne.s32.totalorder %s64, %s65
      %p74 = scmp.eq.s32.totalorder %s19, 0
      %p75 = por %p73, %p74
      %p76 = scmp.ne.s32.totalorder %s64, %s65
      %p77 = scmp.eq.s32.totalorder %s20, 3
      %p78 = por %p76, %p77
      %p80 = scmp.ne.s32.totalorder %s65, %s79
      %p81 = scmp.eq.s32.totalorder %s20, 0
      %p82 = por %p80, %p81
      %s83 = ssub.s32 %s21, %s33
      %p84 = scmp.eq.s32.totalorder %s83, 0
      %s86 = sadd.s32 %s85, 1
      %s87 = scalar_select %p84, %s85, %s86
      %p90 = pneg %p84
      %p91 = scmp.eq.s32.totalorder %s14, 3
      %p92 = por %p90, %p91
      %p93 = scmp.ne.s32.totalorder %s85, %s88
      %p94 = scmp.eq.s32.totalorder %s14, 0
      %p95 = por %p93, %p94
      %p96 = scmp.ne.s32.totalorder %s85, %s88
      %p97 = scmp.eq.s32.totalorder %s19, 3
      %p98 = por %p96, %p97
      %p99 = scmp.ne.s32.totalorder %s88, %s89
      %p100 = scmp.eq.s32.totalorder %s19, 0
      %p101 = por %p99, %p100
      %p102 = scmp.ne.s32.totalorder %s88, %s89
      %p103 = scmp.eq.s32.totalorder %s20, 3
      %p104 = por %p102, %p103
      %p106 = scmp.ne.s32.totalorder %s89, %s105
      %p107 = scmp.eq.s32.totalorder %s20, 0
      %p108 = por %p106, %p107
      %s110 = sadd.s32 %s109, 1
      %p113 = scmp.eq.s32.totalorder %s14, 3
      %p114 = scmp.ne.s32.totalorder %s109, %s111
      %p115 = scmp.eq.s32.totalorder %s14, 0
      %p116 = por %p114, %p115
      %p117 = scmp.ne.s32.totalorder %s109, %s111
      %p118 = scmp.eq.s32.totalorder %s19, 3
      %p119 = por %p117, %p118
      %p120 = scmp.ne.s32.totalorder %s111, %s112
      %p121 = scmp.eq.s32.totalorder %s19, 0
      %p122 = por %p120, %p121
      %p123 = scmp.ne.s32.totalorder %s111, %s112
      %p124 = scmp.eq.s32.totalorder %s20, 3
      %p125 = por %p123, %p124
      %p127 = scmp.ne.s32.totalorder %s112, %s126
      %p128 = scmp.eq.s32.totalorder %s20, 0
      %p129 = por %p127, %p128
      %s130 = ssub.s32 %s21, %s33
      %p131 = scmp.eq.s32.totalorder %s130, 0
      %s133 = sadd.s32 %s132, 1
      %s134 = scalar_select %p131, %s132, %s133
      %p137 = pneg %p131
      %p138 = scmp.eq.s32.totalorder %s14, 3
      %p139 = por %p137, %p138
      %p140 = scmp.ne.s32.totalorder %s132, %s135
      %p141 = scmp.eq.s32.totalorder %s14, 0
      %p142 = por %p140, %p141
      %p143 = scmp.ne.s32.totalorder %s132, %s135
      %p144 = scmp.eq.s32.totalorder %s19, 3
      %p145 = por %p143, %p144
      %p146 = scmp.ne.s32.totalorder %s135, %s136
      %p147 = scmp.eq.s32.totalorder %s19, 0
      %p148 = por %p146, %p147
      %p149 = scmp.ne.s32.totalorder %s135, %s136
      %p150 = scmp.eq.s32.totalorder %s20, 3
      %p151 = por %p149, %p150
      %p153 = scmp.ne.s32.totalorder %s136, %s152
      %p154 = scmp.eq.s32.totalorder %s20, 0
      %p155 = por %p153, %p154
      %p156 = scmp.le.s32.totalorder 1, %s14
      %p157 = scmp.lt.s32.totalorder %s14, 5
      %p158 = pnand %p156, %p157
      %p159 = pneg %p158
      // Predicated region
      $region9: #{tpu_custom_call.1} parent=5 // pred_check
        _
      $region10: #{tpu_custom_call.1} parent=5 // pred_check_branch
        %161 = sbr.rel (%p158) target = $region12
      $region11: #{tpu_custom_call.1} parent=5 // pred_region
        %s162 = ssub.s32 %s14, 1
        // Predicated region
        $region13: #{tpu_custom_call.1} parent=11 // pred_check
          %p163 = pneg %p75
        $region14: #{tpu_custom_call.1} parent=11 // pred_check_branch
          %165 = sbr.rel (%p163) target = $region16
        $region15: #{tpu_custom_call.1} parent=11 // pred_region
          %s167 = ssub.s32 2048, 2048
          %168 = vsyncadd [#allocation5], %s167
          %s169 = sshll.u32 [#allocation4], 4
          %s170 = int_to_ptr.vmem [resolvable:$true] %s169
          %175 = dma.hbm_to_vmem [thread:$0]  %s1, 2048, %s170, [#allocation5], 64, 64, 4
        $region16: #{tpu_custom_call.1} parent=11 // pred_fallthru
          _
        // Predicated region
        $region17: #{tpu_custom_call.1} parent=11 // pred_check
          %p176 = pneg %p122
        $region18: #{tpu_custom_call.1} parent=11 // pred_check_branch
          %178 = sbr.rel (%p176) target = $region20
        $region19: #{tpu_custom_call.1} parent=11 // pred_region
          _
        $region20: #{tpu_custom_call.1} parent=11 // pred_fallthru
          _
      $region12: #{tpu_custom_call.1} parent=5 // pred_fallthru
        _
      %p179 = scmp.lt.s32.totalorder %s14, 4
      // Predicated region
      $region21: #{tpu_custom_call.1} parent=5 // pred_check
        %p180 = pneg %p179
      $region22: #{tpu_custom_call.1} parent=5 // pred_check_branch
        %182 = sbr.rel (%p180) target = $region24
      $region23: #{tpu_custom_call.1} parent=5 // pred_region
        // Predicated region
        $region25: #{tpu_custom_call.1} parent=23 // pred_check
          %p183 = pneg %p48
        $region26: #{tpu_custom_call.1} parent=23 // pred_check_branch
          %185 = sbr.rel (%p183) target = $region28
        $region27: #{tpu_custom_call.1} parent=23 // pred_region
          %s186 = sand.u32 %s38, 1
          %s187 = sand.u32 %s38, 1
          %s188 = smul.addr %s187, 64
          %s189 = scalar_lea.vmem [#allocation3], %s188
          %s190 = smul.u32 16, %s21
          %s191 = smul.addr %s190, 2
          %s192 = sadd.s32 %s22, %s191
          %s193 = smul.addr %s192, 4
          %s194 = scalar_lea.vmem %s0, %s193
          // Predicated region
          $region29: #{tpu_custom_call.1} parent=27 // pred_check
            _
          $region30: #{tpu_custom_call.1} parent=27 // pred_check_branch
            %196 = sbr.rel (0) target = $region32
          $region31: #{tpu_custom_call.1} parent=27 // pred_region
            // Predicated region
            $region33: #{tpu_custom_call.1} parent=31 // pred_check
              _
            $region34: #{tpu_custom_call.1} parent=31 // pred_check_branch
              %198 = sbr.rel target = $region36
            $region35: #{tpu_custom_call.1} parent=31 // pred_region
              // Predicated region
              $region48: #{tpu_custom_call.1} parent=35 // pred_check
                _
              $region49: #{tpu_custom_call.1} parent=35 // pred_check_branch
                %243 = sbr.rel (0) target = $region51
              $region50: #{tpu_custom_call.1} parent=35 // pred_region
                loop: start=0, step=1, limit=1
                $region52: #{tpu_custom_call.1} parent=50 // loop_pre_header
                  _
                $region53: #{tpu_custom_call.1} parent=50 // loop_header
                  %s245 = sphi 0, %s249
                  %p246 = scmp.ge.s32.totalorder %s245, 1
                  %s250 = sphi %s194, %s194
                  %s251 = sphi %s189, %s189
                $region54: #{tpu_custom_call.1} parent=50 // loop_header_branch
                  %248 = sbr.rel (%p246) target = $region58
                $region55: #{tpu_custom_call.1} parent=50 // loop_body
                  _
                $region56: #{tpu_custom_call.1} parent=50 // loop_footer
                  %s249 = sadd.s32 1, %s245
                $region57: #{tpu_custom_call.1} parent=50 // loop_footer_branch
                  %244 = sbr.rel target = $region53
                $region58: #{tpu_custom_call.1} parent=50 // loop_exit
                  _
                loop: start=0, step=1, limit=1
                $region59: #{tpu_custom_call.1} parent=50 // loop_pre_header
                  _
                $region60: #{tpu_custom_call.1} parent=50 // loop_header
                  %s254 = sphi 0, %s258
                  %p255 = scmp.ge.s32.totalorder %s254, 1
                  %s259 = sphi %s194, %s194
                  %s260 = sphi %s189, %s189
                $region61: #{tpu_custom_call.1} parent=50 // loop_header_branch
                  %257 = sbr.rel (%p255) target = $region65
                $region62: #{tpu_custom_call.1} parent=50 // loop_body
                  %v261 = vld [vmem:[%s259] sm:$0xf]
                  %262 = vst [vmem:[%s260] sm:$0xf] %v261
                  %v263 = vld [vmem:[%s259 + $0x8] sm:$0xf]
                  %264 = vst [vmem:[%s260 + $0x4] sm:$0xf] %v263
                  %v265 = vld [vmem:[%s259 + $0x10] sm:$0xf]
                  %266 = vst [vmem:[%s260 + $0x8] sm:$0xf] %v265
                  %v267 = vld [vmem:[%s259 + $0x18] sm:$0xf]
                  %268 = vst [vmem:[%s260 + $0xc] sm:$0xf] %v267
                  %v269 = vld [vmem:[%s259 + $0x20] sm:$0xf]
                  %270 = vst [vmem:[%s260 + $0x10] sm:$0xf] %v269
                  %v271 = vld [vmem:[%s259 + $0x28] sm:$0xf]
                  %272 = vst [vmem:[%s260 + $0x14] sm:$0xf] %v271
                  %v273 = vld [vmem:[%s259 + $0x30] sm:$0xf]
                  %274 = vst [vmem:[%s260 + $0x18] sm:$0xf] %v273
                  %v275 = vld [vmem:[%s259 + $0x38] sm:$0xf]
                  %276 = vst [vmem:[%s260 + $0x1c] sm:$0xf] %v275
                  %v277 = vld [vmem:[%s259 + $0x40] sm:$0xf]
                  %278 = vst [vmem:[%s260 + $0x20] sm:$0xf] %v277
                  %v279 = vld [vmem:[%s259 + $0x48] sm:$0xf]
                  %280 = vst [vmem:[%s260 + $0x24] sm:$0xf] %v279
                  %v281 = vld [vmem:[%s259 + $0x50] sm:$0xf]
                  %282 = vst [vmem:[%s260 + $0x28] sm:$0xf] %v281
                  %v283 = vld [vmem:[%s259 + $0x58] sm:$0xf]
                  %284 = vst [vmem:[%s260 + $0x2c] sm:$0xf] %v283
                  %v285 = vld [vmem:[%s259 + $0x60] sm:$0xf]
                  %286 = vst [vmem:[%s260 + $0x30] sm:$0xf] %v285
                  %v287 = vld [vmem:[%s259 + $0x68] sm:$0xf]
                  %288 = vst [vmem:[%s260 + $0x34] sm:$0xf] %v287
                  %v289 = vld [vmem:[%s259 + $0x70] sm:$0xf]
                  %290 = vst [vmem:[%s260 + $0x38] sm:$0xf] %v289
                  %v291 = vld [vmem:[%s259 + $0x78] sm:$0xf]
                  %292 = vst [vmem:[%s260 + $0x3c] sm:$0xf] %v291
                $region63: #{tpu_custom_call.1} parent=50 // loop_footer
                  %s258 = sadd.s32 1, %s254
                $region64: #{tpu_custom_call.1} parent=50 // loop_footer_branch
                  %253 = sbr.rel target = $region60
                $region65: #{tpu_custom_call.1} parent=50 // loop_exit
                  _
              $region51: #{tpu_custom_call.1} parent=35 // pred_fallthru
                _
            $region36: #{tpu_custom_call.1} parent=31 // pred_fallthru
              _
            // Predicated region
            $region37: #{tpu_custom_call.1} parent=31 // pred_check
              _
            $region38: #{tpu_custom_call.1} parent=31 // pred_check_branch
              %200 = sbr.rel (0) target = $region40
            $region39: #{tpu_custom_call.1} parent=31 // pred_region
              loop: start=0, step=1, limit=1
              $region41: #{tpu_custom_call.1} parent=39 // loop_pre_header
                _
              $region42: #{tpu_custom_call.1} parent=39 // loop_header
                %s203 = sphi 0, %s207
                %p204 = scmp.ge.s32.totalorder %s203, 1
                %s208 = sphi %s194, %s194
                %s209 = sphi %s189, %s189
              $region43: #{tpu_custom_call.1} parent=39 // loop_header_branch
                %206 = sbr.rel (%p204) target = $region47
              $region44: #{tpu_custom_call.1} parent=39 // loop_body
                %v210 = vld [vmem:[%s208] sm:$0xf]
                %211 = vst [vmem:[%s209] sm:$0xf] %v210
                %v212 = vld [vmem:[%s208 + $0x8] sm:$0xf]
                %213 = vst [vmem:[%s209 + $0x4] sm:$0xf] %v212
                %v214 = vld [vmem:[%s208 + $0x10] sm:$0xf]
                %215 = vst [vmem:[%s209 + $0x8] sm:$0xf] %v214
                %v216 = vld [vmem:[%s208 + $0x18] sm:$0xf]
                %217 = vst [vmem:[%s209 + $0xc] sm:$0xf] %v216
                %v218 = vld [vmem:[%s208 + $0x20] sm:$0xf]
                %219 = vst [vmem:[%s209 + $0x10] sm:$0xf] %v218
                %v220 = vld [vmem:[%s208 + $0x28] sm:$0xf]
                %221 = vst [vmem:[%s209 + $0x14] sm:$0xf] %v220
                %v222 = vld [vmem:[%s208 + $0x30] sm:$0xf]
                %223 = vst [vmem:[%s209 + $0x18] sm:$0xf] %v222
                %v224 = vld [vmem:[%s208 + $0x38] sm:$0xf]
                %225 = vst [vmem:[%s209 + $0x1c] sm:$0xf] %v224
                %v226 = vld [vmem:[%s208 + $0x40] sm:$0xf]
                %227 = vst [vmem:[%s209 + $0x20] sm:$0xf] %v226
                %v228 = vld [vmem:[%s208 + $0x48] sm:$0xf]
                %229 = vst [vmem:[%s209 + $0x24] sm:$0xf] %v228
                %v230 = vld [vmem:[%s208 + $0x50] sm:$0xf]
                %231 = vst [vmem:[%s209 + $0x28] sm:$0xf] %v230
                %v232 = vld [vmem:[%s208 + $0x58] sm:$0xf]
                %233 = vst [vmem:[%s209 + $0x2c] sm:$0xf] %v232
                %v234 = vld [vmem:[%s208 + $0x60] sm:$0xf]
                %235 = vst [vmem:[%s209 + $0x30] sm:$0xf] %v234
                %v236 = vld [vmem:[%s208 + $0x68] sm:$0xf]
                %237 = vst [vmem:[%s209 + $0x34] sm:$0xf] %v236
                %v238 = vld [vmem:[%s208 + $0x70] sm:$0xf]
                %239 = vst [vmem:[%s209 + $0x38] sm:$0xf] %v238
                %v240 = vld [vmem:[%s208 + $0x78] sm:$0xf]
                %241 = vst [vmem:[%s209 + $0x3c] sm:$0xf] %v240
              $region45: #{tpu_custom_call.1} parent=39 // loop_footer
                %s207 = sadd.s32 1, %s203
              $region46: #{tpu_custom_call.1} parent=39 // loop_footer_branch
                %202 = sbr.rel target = $region42
              $region47: #{tpu_custom_call.1} parent=39 // loop_exit
                _
            $region40: #{tpu_custom_call.1} parent=31 // pred_fallthru
              _
          $region32: #{tpu_custom_call.1} parent=27 // pred_fallthru
            _
          %293 = vnop
        $region28: #{tpu_custom_call.1} parent=23 // pred_fallthru
          _
        // Predicated region
        $region66: #{tpu_custom_call.1} parent=23 // pred_check
          %p294 = pneg %p95
        $region67: #{tpu_custom_call.1} parent=23 // pred_check_branch
          %296 = sbr.rel (%p294) target = $region69
        $region68: #{tpu_custom_call.1} parent=23 // pred_region
          %s297 = smul.u32 16, %s21
          %p298 = scmp.lt.s32.totalorder %s297, 31
          %s299 = scalar_select %p298, %s297, 31
          %s300 = smul.addr %s299, 8
          %s301 = scalar_lea.vmem %s2, %s300
          %s302 = smul.u32 16, %s21
        $region69: #{tpu_custom_call.1} parent=23 // pred_fallthru
          _
      $region24: #{tpu_custom_call.1} parent=5 // pred_fallthru
        _
      %p303 = scmp.le.s32.totalorder 1, %s14
      %p304 = scmp.lt.s32.totalorder %s14, 5
      %p305 = pnand %p303, %p304
      %p306 = pneg %p305
      // Predicated region
      $region70: #{tpu_custom_call.1} parent=5 // pred_check
        _
      $region71: #{tpu_custom_call.1} parent=5 // pred_check_branch
        %308 = sbr.rel (%p305) target = $region73
      $region72: #{tpu_custom_call.1} parent=5 // pred_region
        %s309 = ssub.s32 %s14, 1
        %s310 = sand.u32 %s41, 1
        %s311 = sand.u32 %s41, 1
        %s312 = smul.addr %s311, 64
        %s313 = scalar_lea.vmem [#allocation3], %s312
        // Predicated region
        $region74: #{tpu_custom_call.1} parent=72 // pred_check
          %p314 = pneg %p54
        $region75: #{tpu_custom_call.1} parent=72 // pred_check_branch
          %316 = sbr.rel (%p314) target = $region77
        $region76: #{tpu_custom_call.1} parent=72 // pred_region
          _
        $region77: #{tpu_custom_call.1} parent=72 // pred_fallthru
          _
        // Predicated region
        $region78: #{tpu_custom_call.1} parent=72 // pred_check
          %p317 = pneg %p75
        $region79: #{tpu_custom_call.1} parent=72 // pred_check_branch
          %319 = sbr.rel (%p317) target = $region81
        $region80: #{tpu_custom_call.1} parent=72 // pred_region
          %320 = dma.done [#allocation5], 2048
        $region81: #{tpu_custom_call.1} parent=72 // pred_fallthru
          _
        %s321 = sand.u32 %s41, 1
        %s322 = sand.u32 %s41, 1
        %s323 = smul.addr %s322, 64
        %s324 = scalar_lea.vmem [#allocation3], %s323
        %p325 = pneg %p54
        %p326 = pneg %p51
        %p327 = pneg %p75
        %p328 = pneg %p72
        %s329 = smul.u32 16, %s23
        %p330 = scmp.lt.s32.totalorder %s329, 31
        %s331 = scalar_select %p330, %s329, 31
        %s332 = smul.addr %s331, 8
        %s333 = scalar_lea.vmem %s2, %s332
        %p334 = pneg %p101
        %p335 = pneg %p98
        %p336 = pneg %p122
        %p337 = pneg %p119
        %p338 = pneg %p148
        %p339 = pneg %p145
        %s340 = sand.u32 %s135, 1
        %s341 = scalar_lea.sflag [#allocation6], %s340
        %s342 = sand.u32 %s135, 1
        %s343 = smul.addr %s342, 128
        %s344 = scalar_lea.vmem [#allocation7], %s343
        %s345 = smul.u32 16, %s23
        %s346 = smul.u32 16, %s23
        %p347 = scmp.lt.s32.totalorder %s346, 31
        %s348 = scalar_select %p347, %s346, 31
        %s349 = smul.addr %s348, 8
        %s350 = scalar_lea.vmem %s2, %s349
        %s351 = smul.u32 16, %s23
        %s352 = smul.u32 16, %s23
        %p354 = scmp.eq.s32.totalorder %s24, 0
        // Predicated region
        $region82: #{tpu_custom_call.1} parent=72 // pred_check
          %p355 = pneg %p354
        $region83: #{tpu_custom_call.1} parent=72 // pred_check_branch
          %357 = sbr.rel (%p355) target = $region85
        $region84: #{tpu_custom_call.1} parent=72 // pred_region
          %358 = vst [vmem:[#allocation2] sm:$0xff] 0.0
          %359 = vst [vmem:[#allocation2 + $0x8] sm:$0xff] 0.0
          %360 = vst [vmem:[#allocation2 + $0x10] sm:$0xff] 0.0
          %361 = vst [vmem:[#allocation2 + $0x18] sm:$0xff] 0.0
          %362 = vst [vmem:[#allocation2 + $0x20] sm:$0xff] 0.0
          %363 = vst [vmem:[#allocation2 + $0x28] sm:$0xff] 0.0
          %364 = vst [vmem:[#allocation2 + $0x30] sm:$0xff] 0.0
          %365 = vst [vmem:[#allocation2 + $0x38] sm:$0xff] 0.0
          %366 = vst [vmem:[#allocation2 + $0x40] sm:$0xff] 0.0
          %367 = vst [vmem:[#allocation2 + $0x48] sm:$0xff] 0.0
          %368 = vst [vmem:[#allocation2 + $0x50] sm:$0xff] 0.0
          %369 = vst [vmem:[#allocation2 + $0x58] sm:$0xff] 0.0
          %370 = vst [vmem:[#allocation2 + $0x60] sm:$0xff] 0.0
          %371 = vst [vmem:[#allocation2 + $0x68] sm:$0xff] 0.0
          %372 = vst [vmem:[#allocation2 + $0x70] sm:$0xff] 0.0
          %373 = vst [vmem:[#allocation2 + $0x78] sm:$0xff] 0.0
        $region85: #{tpu_custom_call.1} parent=72 // pred_fallthru
          _
        %s374 = smul.u32 %s24, 128
        %s375 = sshra.s32 %s374, 3
        %s376 = sand.u32 %s374, 7
        %s377 = smul.addr %s375, 4
        %s378 = scalar_lea.vmem [#allocation4], %s377
        %v379 = vld [vmem:[%s378] sm:$0xf]
        %v380 = vld [vmem:[%s378 + $0x4] sm:$0xf]
        %v381 = vld [vmem:[%s378 + $0x8] sm:$0xf]
        %v382 = vld [vmem:[%s378 + $0xc] sm:$0xf]
        %v383 = vld [vmem:[%s378 + $0x10] sm:$0xf]
        %v384 = vld [vmem:[%s378 + $0x14] sm:$0xf]
        %v385 = vld [vmem:[%s378 + $0x18] sm:$0xf]
        %v386 = vld [vmem:[%s378 + $0x1c] sm:$0xf]
        %v387 = vld [vmem:[%s378 + $0x20] sm:$0xf]
        %v388 = vld [vmem:[%s378 + $0x24] sm:$0xf]
        %v389 = vld [vmem:[%s378 + $0x28] sm:$0xf]
        %v390 = vld [vmem:[%s378 + $0x2c] sm:$0xf]
        %v391 = vld [vmem:[%s378 + $0x30] sm:$0xf]
        %v392 = vld [vmem:[%s378 + $0x34] sm:$0xf]
        %v393 = vld [vmem:[%s378 + $0x38] sm:$0xf]
        %v394 = vld [vmem:[%s378 + $0x3c] sm:$0xf]
        %v395 = vld [vmem:[#allocation2] sm:$0xff]
        %v396 = vld [vmem:[#allocation2 + $0x8] sm:$0xff]
        %v397 = vld [vmem:[#allocation2 + $0x10] sm:$0xff]
        %v398 = vld [vmem:[#allocation2 + $0x18] sm:$0xff]
        %v399 = vld [vmem:[#allocation2 + $0x20] sm:$0xff]
        %v400 = vld [vmem:[#allocation2 + $0x28] sm:$0xff]
        %v401 = vld [vmem:[#allocation2 + $0x30] sm:$0xff]
        %v402 = vld [vmem:[#allocation2 + $0x38] sm:$0xff]
        %v403 = vld [vmem:[#allocation2 + $0x40] sm:$0xff]
        %v404 = vld [vmem:[#allocation2 + $0x48] sm:$0xff]
        %v405 = vld [vmem:[#allocation2 + $0x50] sm:$0xff]
        %v406 = vld [vmem:[#allocation2 + $0x58] sm:$0xff]
        %v407 = vld [vmem:[#allocation2 + $0x60] sm:$0xff]
        %v408 = vld [vmem:[#allocation2 + $0x68] sm:$0xff]
        %v409 = vld [vmem:[#allocation2 + $0x70] sm:$0xff]
        %v410 = vld [vmem:[#allocation2 + $0x78] sm:$0xff]
        %v411 = vld [vmem:[%s313] sm:$0xf]
        %v412 = vld [vmem:[%s313 + $0x4] sm:$0xf]
        %v413 = vld [vmem:[%s313 + $0x8] sm:$0xf]
        %v414 = vld [vmem:[%s313 + $0xc] sm:$0xf]
        %v415 = vld [vmem:[%s313 + $0x10] sm:$0xf]
        %v416 = vld [vmem:[%s313 + $0x14] sm:$0xf]
        %v417 = vld [vmem:[%s313 + $0x18] sm:$0xf]
        %v418 = vld [vmem:[%s313 + $0x1c] sm:$0xf]
        %v419 = vld [vmem:[%s313 + $0x20] sm:$0xf]
        %v420 = vld [vmem:[%s313 + $0x24] sm:$0xf]
        %v421 = vld [vmem:[%s313 + $0x28] sm:$0xf]
        %v422 = vld [vmem:[%s313 + $0x2c] sm:$0xf]
        %v423 = vld [vmem:[%s313 + $0x30] sm:$0xf]
        %v424 = vld [vmem:[%s313 + $0x34] sm:$0xf]
        %v425 = vld [vmem:[%s313 + $0x38] sm:$0xf]
        %v426 = vld [vmem:[%s313 + $0x3c] sm:$0xf]
        %v443 = vunpack.c.l.b16 %v411
        %v444 = vunpack.c.l.b16 %v412
        %v445 = vunpack.c.l.b16 %v413
        %v446 = vunpack.c.l.b16 %v414
        %v447 = vunpack.c.l.b16 %v415
        %v448 = vunpack.c.l.b16 %v416
        %v449 = vunpack.c.l.b16 %v417
        %v450 = vunpack.c.l.b16 %v418
        %v451 = vunpack.c.l.b16 %v419
        %v452 = vunpack.c.l.b16 %v420
        %v453 = vunpack.c.l.b16 %v421
        %v454 = vunpack.c.l.b16 %v422
        %v455 = vunpack.c.l.b16 %v423
        %v456 = vunpack.c.l.b16 %v424
        %v457 = vunpack.c.l.b16 %v425
        %v458 = vunpack.c.l.b16 %v426
        %v459 = vpack.c.b16 %v444, %v443
        %v460 = vpack.c.b16 %v446, %v445
        %v461 = vpack.c.b16 %v448, %v447
        %v462 = vpack.c.b16 %v450, %v449
        %v463 = vpack.c.b16 %v452, %v451
        %v464 = vpack.c.b16 %v454, %v453
        %v465 = vpack.c.b16 %v456, %v455
        %v466 = vpack.c.b16 %v458, %v457
        %v491 = vunpack.c.l.b16 %v379
        %v492 = vunpack.c.l.b16 %v380
        %v493 = vunpack.c.l.b16 %v381
        %v494 = vunpack.c.l.b16 %v382
        %v495 = vunpack.c.l.b16 %v383
        %v496 = vunpack.c.l.b16 %v384
        %v497 = vunpack.c.l.b16 %v385
        %v498 = vunpack.c.l.b16 %v386
        %v499 = vunpack.c.l.b16 %v387
        %v500 = vunpack.c.l.b16 %v388
        %v501 = vunpack.c.l.b16 %v389
        %v502 = vunpack.c.l.b16 %v390
        %v503 = vunpack.c.l.b16 %v391
        %v504 = vunpack.c.l.b16 %v392
        %v505 = vunpack.c.l.b16 %v393
        %v506 = vunpack.c.l.b16 %v394
        %v507 = vpack.c.b16 %v492, %v491
        %v508 = vpack.c.b16 %v494, %v493
        %v509 = vpack.c.b16 %v496, %v495
        %v510 = vpack.c.b16 %v498, %v497
        %v511 = vpack.c.b16 %v500, %v499
        %v512 = vpack.c.b16 %v502, %v501
        %v513 = vpack.c.b16 %v504, %v503
        %v514 = vpack.c.b16 %v506, %v505
        %523 = vmatprep.subr.bf16.mxu0 0
        %524 = vmatpush1.bf16.msra.mxu0 %v507
        %525 = vmatprep.subr.bf16.mxu0 0
        %526 = vmatpush1.bf16.msra.mxu0 %v508
        %527 = vmatprep.subr.bf16.mxu0 0
        %528 = vmatpush1.bf16.msra.mxu0 %v509
        %529 = vmatprep.subr.bf16.mxu0 0
        %530 = vmatpush1.bf16.msra.mxu0 %v510
        %531 = vmatprep.subr.bf16.mxu0 0
        %532 = vmatpush1.bf16.msra.mxu0 %v511
        %533 = vmatprep.subr.bf16.mxu0 0
        %534 = vmatpush1.bf16.msra.mxu0 %v512
        %535 = vmatprep.subr.bf16.mxu0 0
        %536 = vmatpush1.bf16.msra.mxu0 %v513
        %537 = vmatprep.subr.bf16.mxu0 0
        %538 = vmatpush1.bf16.msra.mxu0 %v514
        %539 = vmatprep.subr.bf16.mxu0 0
        %540 = vmatpush1.bf16.msra.mxu0 0
        %541 = vmatprep.subr.bf16.mxu0 0
        %542 = vmatpush1.bf16.msra.mxu0 0
        %543 = vmatprep.subr.bf16.mxu0 0
        %544 = vmatpush1.bf16.msra.mxu0 0
        %545 = vmatprep.subr.bf16.mxu0 0
        %546 = vmatpush1.bf16.msra.mxu0 0
        %547 = vmatprep.subr.bf16.mxu0 0
        %548 = vmatpush1.bf16.msra.mxu0 0
        %549 = vmatprep.subr.bf16.mxu0 0
        %550 = vmatpush1.bf16.msra.mxu0 0
        %551 = vmatprep.subr.bf16.mxu0 0
        %552 = vmatpush1.bf16.msra.mxu0 0
        %553 = vmatprep.subr.bf16.mxu0 0
        %554 = vmatpush1.bf16.msra.mxu0 0
        %555 = vmatprep.mubr.bf16.mxu0 0
        %556 = vmatmul.mubr.bf16.gmra.mrb[0].mxu0 %v459
        %v557 = vpop.f32.mrb[0].mxu0
        %v558 = vadd.f32 0.0, %v557
        %v559 = vpop.f32.mrb[0].mxu0
        %v560 = vpop.f32.mrb[0].mxu0
        %v561 = vadd.f32 0.0, %v560
        %v562 = vpop.f32.mrb[0].mxu0
        %563 = vmatprep.mubr.bf16.mxu0 0
        %564 = vmatmul.mubr.bf16.gmra.mrb[0].mxu0 %v460
        %v565 = vpop.f32.mrb[0].mxu0
        %v566 = vadd.f32 0.0, %v565
        %v567 = vpop.f32.mrb[0].mxu0
        %v568 = vpop.f32.mrb[0].mxu0
        %v569 = vadd.f32 0.0, %v568
        %v570 = vpop.f32.mrb[0].mxu0
        %571 = vmatprep.mubr.bf16.mxu0 0
        %572 = vmatmul.mubr.bf16.gmra.mrb[0].mxu0 %v461
        %v573 = vpop.f32.mrb[0].mxu0
        %v574 = vadd.f32 0.0, %v573
        %v575 = vpop.f32.mrb[0].mxu0
        %v576 = vpop.f32.mrb[0].mxu0
        %v577 = vadd.f32 0.0, %v576
        %v578 = vpop.f32.mrb[0].mxu0
        %579 = vmatprep.mubr.bf16.mxu0 0
        %580 = vmatmul.mubr.bf16.gmra.mrb[0].mxu0 %v462
        %v581 = vpop.f32.mrb[0].mxu0
        %v582 = vadd.f32 0.0, %v581
        %v583 = vpop.f32.mrb[0].mxu0
        %v584 = vpop.f32.mrb[0].mxu0
        %v585 = vadd.f32 0.0, %v584
        %v586 = vpop.f32.mrb[0].mxu0
        %587 = vmatprep.mubr.bf16.mxu0 0
        %588 = vmatmul.mubr.bf16.gmra.mrb[0].mxu0 %v463
        %v589 = vpop.f32.mrb[0].mxu0
        %v590 = vadd.f32 0.0, %v589
        %v591 = vpop.f32.mrb[0].mxu0
        %v592 = vpop.f32.mrb[0].mxu0
        %v593 = vadd.f32 0.0, %v592
        %v594 = vpop.f32.mrb[0].mxu0
        %595 = vmatprep.mubr.bf16.mxu0 0
        %596 = vmatmul.mubr.bf16.gmra.mrb[0].mxu0 %v464
        %v597 = vpop.f32.mrb[0].mxu0
        %v598 = vadd.f32 0.0, %v597
        %v599 = vpop.f32.mrb[0].mxu0
        %v600 = vpop.f32.mrb[0].mxu0
        %v601 = vadd.f32 0.0, %v600
        %v602 = vpop.f32.mrb[0].mxu0
        %603 = vmatprep.mubr.bf16.mxu0 0
        %604 = vmatmul.mubr.bf16.gmra.mrb[0].mxu0 %v465
        %v605 = vpop.f32.mrb[0].mxu0
        %v606 = vadd.f32 0.0, %v605
        %v607 = vpop.f32.mrb[0].mxu0
        %v608 = vpop.f32.mrb[0].mxu0
        %v609 = vadd.f32 0.0, %v608
        %v610 = vpop.f32.mrb[0].mxu0
        %611 = vmatprep.mubr.bf16.mxu0 0
        %612 = vmatmul.mubr.bf16.gmra.mrb[0].mxu0 %v466
        %v613 = vpop.f32.mrb[0].mxu0
        %v614 = vadd.f32 0.0, %v613
        %v615 = vpop.f32.mrb[0].mxu0
        %v616 = vpop.f32.mrb[0].mxu0
        %v617 = vadd.f32 0.0, %v616
        %v618 = vpop.f32.mrb[0].mxu0
        %619 = vdwg.mxu0
        %v620 = vadd.f32 %v395, %v558
        %v621 = vadd.f32 %v396, %v561
        %v622 = vadd.f32 %v397, %v566
        %v623 = vadd.f32 %v398, %v569
        %v624 = vadd.f32 %v399, %v574
        %v625 = vadd.f32 %v400, %v577
        %v626 = vadd.f32 %v401, %v582
        %v627 = vadd.f32 %v402, %v585
        %v628 = vadd.f32 %v403, %v590
        %v629 = vadd.f32 %v404, %v593
        %v630 = vadd.f32 %v405, %v598
        %v631 = vadd.f32 %v406, %v601
        %v632 = vadd.f32 %v407, %v606
        %v633 = vadd.f32 %v408, %v609
        %v634 = vadd.f32 %v409, %v614
        %v635 = vadd.f32 %v410, %v617
        %636 = vst [vmem:[#allocation2] sm:$0xff] %v620
        %637 = vst [vmem:[#allocation2 + $0x8] sm:$0xff] %v621
        %638 = vst [vmem:[#allocation2 + $0x10] sm:$0xff] %v622
        %639 = vst [vmem:[#allocation2 + $0x18] sm:$0xff] %v623
        %640 = vst [vmem:[#allocation2 + $0x20] sm:$0xff] %v624
        %641 = vst [vmem:[#allocation2 + $0x28] sm:$0xff] %v625
        %642 = vst [vmem:[#allocation2 + $0x30] sm:$0xff] %v626
        %643 = vst [vmem:[#allocation2 + $0x38] sm:$0xff] %v627
        %644 = vst [vmem:[#allocation2 + $0x40] sm:$0xff] %v628
        %645 = vst [vmem:[#allocation2 + $0x48] sm:$0xff] %v629
        %646 = vst [vmem:[#allocation2 + $0x50] sm:$0xff] %v630
        %647 = vst [vmem:[#allocation2 + $0x58] sm:$0xff] %v631
        %648 = vst [vmem:[#allocation2 + $0x60] sm:$0xff] %v632
        %649 = vst [vmem:[#allocation2 + $0x68] sm:$0xff] %v633
        %650 = vst [vmem:[#allocation2 + $0x70] sm:$0xff] %v634
        %651 = vst [vmem:[#allocation2 + $0x78] sm:$0xff] %v635
        %p652 = scmp.eq.s32.totalorder %s24, 1
        // Predicated region
        $region86: #{tpu_custom_call.1} parent=72 // pred_check
          %p653 = pneg %p652
        $region87: #{tpu_custom_call.1} parent=72 // pred_check_branch
          %655 = sbr.rel (%p653) target = $region89
        $region88: #{tpu_custom_call.1} parent=72 // pred_region
          %v656 = vld [vmem:[%s350] sm:$0xff]
          %v657 = vld [vmem:[%s350 + $0x8] sm:$0xff]
          %v658 = vld [vmem:[%s350 + $0x10] sm:$0xff]
          %v659 = vld [vmem:[%s350 + $0x18] sm:$0xff]
          %v660 = vld [vmem:[%s350 + $0x20] sm:$0xff]
          %v661 = vld [vmem:[%s350 + $0x28] sm:$0xff]
          %v662 = vld [vmem:[%s350 + $0x30] sm:$0xff]
          %v663 = vld [vmem:[%s350 + $0x38] sm:$0xff]
          %v664 = vld [vmem:[%s350 + $0x40] sm:$0xff]
          %v665 = vld [vmem:[%s350 + $0x48] sm:$0xff]
          %v666 = vld [vmem:[%s350 + $0x50] sm:$0xff]
          %v667 = vld [vmem:[%s350 + $0x58] sm:$0xff]
          %v668 = vld [vmem:[%s350 + $0x60] sm:$0xff]
          %v669 = vld [vmem:[%s350 + $0x68] sm:$0xff]
          %v670 = vld [vmem:[%s350 + $0x70] sm:$0xff]
          %v671 = vld [vmem:[%s350 + $0x78] sm:$0xff]
          %v672 = vld [vmem:[#allocation2] sm:$0xff]
          %v673 = vld [vmem:[#allocation2 + $0x8] sm:$0xff]
          %v674 = vld [vmem:[#allocation2 + $0x10] sm:$0xff]
          %v675 = vld [vmem:[#allocation2 + $0x18] sm:$0xff]
          %v676 = vld [vmem:[#allocation2 + $0x20] sm:$0xff]
          %v677 = vld [vmem:[#allocation2 + $0x28] sm:$0xff]
          %v678 = vld [vmem:[#allocation2 + $0x30] sm:$0xff]
          %v679 = vld [vmem:[#allocation2 + $0x38] sm:$0xff]
          %v680 = vld [vmem:[#allocation2 + $0x40] sm:$0xff]
          %v681 = vld [vmem:[#allocation2 + $0x48] sm:$0xff]
          %v682 = vld [vmem:[#allocation2 + $0x50] sm:$0xff]
          %v683 = vld [vmem:[#allocation2 + $0x58] sm:$0xff]
          %v684 = vld [vmem:[#allocation2 + $0x60] sm:$0xff]
          %v685 = vld [vmem:[#allocation2 + $0x68] sm:$0xff]
          %v686 = vld [vmem:[#allocation2 + $0x70] sm:$0xff]
          %v687 = vld [vmem:[#allocation2 + $0x78] sm:$0xff]
          %689 = vset.pattern.permute.xlu0 0
          %690 = vperm.xlu0 %689, %v656
          %v691 = vpop.permute.xlu0 %690
          %694 = vset.pattern.permute.xlu0 0
          %695 = vperm.xlu0 %694, %v657
          %v696 = vpop.permute.xlu0 %695
          %699 = vset.pattern.permute.xlu0 0
          %700 = vperm.xlu0 %699, %v658
          %v701 = vpop.permute.xlu0 %700
          %704 = vset.pattern.permute.xlu0 0
          %705 = vperm.xlu0 %704, %v659
          %v706 = vpop.permute.xlu0 %705
          %709 = vset.pattern.permute.xlu0 0
          %710 = vperm.xlu0 %709, %v660
          %v711 = vpop.permute.xlu0 %710
          %714 = vset.pattern.permute.xlu0 0
          %715 = vperm.xlu0 %714, %v661
          %v716 = vpop.permute.xlu0 %715
          %719 = vset.pattern.permute.xlu0 0
          %720 = vperm.xlu0 %719, %v662
          %v721 = vpop.permute.xlu0 %720
          %724 = vset.pattern.permute.xlu0 0
          %725 = vperm.xlu0 %724, %v663
          %v726 = vpop.permute.xlu0 %725
          %729 = vset.pattern.permute.xlu0 0
          %730 = vperm.xlu0 %729, %v664
          %v731 = vpop.permute.xlu0 %730
          %734 = vset.pattern.permute.xlu0 0
          %735 = vperm.xlu0 %734, %v665
          %v736 = vpop.permute.xlu0 %735
          %739 = vset.pattern.permute.xlu0 0
          %740 = vperm.xlu0 %739, %v666
          %v741 = vpop.permute.xlu0 %740
          %744 = vset.pattern.permute.xlu0 0
          %745 = vperm.xlu0 %744, %v667
          %v746 = vpop.permute.xlu0 %745
          %749 = vset.pattern.permute.xlu0 0
          %750 = vperm.xlu0 %749, %v668
          %v751 = vpop.permute.xlu0 %750
          %754 = vset.pattern.permute.xlu0 0
          %755 = vperm.xlu0 %754, %v669
          %v756 = vpop.permute.xlu0 %755
          %759 = vset.pattern.permute.xlu0 0
          %760 = vperm.xlu0 %759, %v670
          %v761 = vpop.permute.xlu0 %760
          %764 = vset.pattern.permute.xlu0 0
          %765 = vperm.xlu0 %764, %v671
          %v766 = vpop.permute.xlu0 %765
          %v768 = vmul.f32 %v691, %v672
          %v769 = vmul.f32 %v696, %v673
          %v770 = vmul.f32 %v701, %v674
          %v771 = vmul.f32 %v706, %v675
          %v772 = vmul.f32 %v711, %v676
          %v773 = vmul.f32 %v716, %v677
          %v774 = vmul.f32 %v721, %v678
          %v775 = vmul.f32 %v726, %v679
          %v776 = vmul.f32 %v731, %v680
          %v777 = vmul.f32 %v736, %v681
          %v778 = vmul.f32 %v741, %v682
          %v779 = vmul.f32 %v746, %v683
          %v780 = vmul.f32 %v751, %v684
          %v781 = vmul.f32 %v756, %v685
          %v782 = vmul.f32 %v761, %v686
          %v783 = vmul.f32 %v766, %v687
          %v784 = vld [vmem:[%s3] sm:$0x1]
          %v786 = vlaneseq
          %v787 = vshrl.u32 %v786, 7
          %v788 = vsub.s32 0, %v787
          %v789 = vrot.slane %v784, %v788
          %v791 = vadd.f32 %v768, %v789
          %v792 = vadd.f32 %v769, %v789
          %v793 = vadd.f32 %v770, %v789
          %v794 = vadd.f32 %v771, %v789
          %v795 = vadd.f32 %v772, %v789
          %v796 = vadd.f32 %v773, %v789
          %v797 = vadd.f32 %v774, %v789
          %v798 = vadd.f32 %v775, %v789
          %v799 = vadd.f32 %v776, %v789
          %v800 = vadd.f32 %v777, %v789
          %v801 = vadd.f32 %v778, %v789
          %v802 = vadd.f32 %v779, %v789
          %v803 = vadd.f32 %v780, %v789
          %v804 = vadd.f32 %v781, %v789
          %v805 = vadd.f32 %v782, %v789
          %v806 = vadd.f32 %v783, %v789
          %807 = vst [vmem:[%s344] sm:$0xff] %v791
          %808 = vst [vmem:[%s344 + $0x8] sm:$0xff] %v792
          %809 = vst [vmem:[%s344 + $0x10] sm:$0xff] %v793
          %810 = vst [vmem:[%s344 + $0x18] sm:$0xff] %v794
          %811 = vst [vmem:[%s344 + $0x20] sm:$0xff] %v795
          %812 = vst [vmem:[%s344 + $0x28] sm:$0xff] %v796
          %813 = vst [vmem:[%s344 + $0x30] sm:$0xff] %v797
          %814 = vst [vmem:[%s344 + $0x38] sm:$0xff] %v798
          %815 = vst [vmem:[%s344 + $0x40] sm:$0xff] %v799
          %816 = vst [vmem:[%s344 + $0x48] sm:$0xff] %v800
          %817 = vst [vmem:[%s344 + $0x50] sm:$0xff] %v801
          %818 = vst [vmem:[%s344 + $0x58] sm:$0xff] %v802
          %819 = vst [vmem:[%s344 + $0x60] sm:$0xff] %v803
          %820 = vst [vmem:[%s344 + $0x68] sm:$0xff] %v804
          %821 = vst [vmem:[%s344 + $0x70] sm:$0xff] %v805
          %822 = vst [vmem:[%s344 + $0x78] sm:$0xff] %v806
        $region89: #{tpu_custom_call.1} parent=72 // pred_fallthru
          _
        %s823 = sand.u32 %s135, 1
        %s824 = scalar_lea.sflag [#allocation6], %s823
        %s825 = sand.u32 %s135, 1
        %s826 = smul.addr %s825, 128
        %s827 = scalar_lea.vmem [#allocation7], %s826
        // Predicated region
        $region90: #{tpu_custom_call.1} parent=72 // pred_check
          %p828 = pneg %p145
        $region91: #{tpu_custom_call.1} parent=72 // pred_check_branch
          %830 = sbr.rel (%p828) target = $region93
        $region92: #{tpu_custom_call.1} parent=72 // pred_region
          %s831 = smul.u32 16, %s23
          %s833 = ssub.s32 2048, 2048
          %834 = vsyncadd %s824, %s833
          %s835 = smul.addr %s831, 128
          %s836 = scalar_lea.hbm %s4, %s835
          %s837 = sshll.u32 %s827, 4
          %s838 = int_to_ptr.vmem [resolvable:$true] %s837
          %843 = dma.vmem_to_hbm [thread:$0]  %s838, 2048, %s836, %s824, 128, 128, 8
        $region93: #{tpu_custom_call.1} parent=72 // pred_fallthru
          _
      $region73: #{tpu_custom_call.1} parent=5 // pred_fallthru
        _
      %p844 = scmp.le.s32.totalorder 2, %s14
      // Predicated region
      $region94: #{tpu_custom_call.1} parent=5 // pred_check
        %p845 = pneg %p844
      $region95: #{tpu_custom_call.1} parent=5 // pred_check_branch
        %847 = sbr.rel (%p845) target = $region97
      $region96: #{tpu_custom_call.1} parent=5 // pred_region
        %s848 = ssub.s32 %s14, 2
        // Predicated region
        $region98: #{tpu_custom_call.1} parent=96 // pred_check
          %p849 = pneg %p151
        $region99: #{tpu_custom_call.1} parent=96 // pred_check_branch
          %851 = sbr.rel (%p849) target = $region101
        $region100: #{tpu_custom_call.1} parent=96 // pred_region
          %s852 = sand.u32 %s136, 1
          %s853 = scalar_lea.sflag [#allocation6], %s852
          %s854 = sand.u32 %s136, 1
          %s855 = smul.addr %s854, 128
          %s856 = scalar_lea.vmem [#allocation7], %s855
          %857 = dma.done %s853, 2048
        $region101: #{tpu_custom_call.1} parent=96 // pred_fallthru
          _
      $region97: #{tpu_custom_call.1} parent=5 // pred_fallthru
        _
    $region6: #{tpu_custom_call.1} parent=1 // loop_footer
      %s18 = sadd.s32 1, %s14
    $region7: #{tpu_custom_call.1} parent=1 // loop_footer_branch
      %13 = sbr.rel target = $region3
    $region8: #{tpu_custom_call.1} parent=1 // loop_exit
      _
    %858 = vsyncpa [#allocation5], 1
    %s859 = scalar_lea.sflag [#allocation5], 1
    %860 = vsyncpa %s859, 1
    %861 = vsyncpa [#allocation6], 1
    %s862 = scalar_lea.sflag [#allocation6], 1
    %863 = vsyncpa %s862, 1

</llo_original>
